<compile_context>
chip_gen: v7x
topology: tpu7x:2x2x1
jax: 0.10.0
libtpu: 0.0.40
codegen_flags: <defaults>
</compile_context>

<pallas_src>
import jax
import jax.numpy as jnp
from jax.experimental import pallas as pl
from jax.experimental.pallas import tpu as pltpu

# ----------------------------- configuration -------------------------------
D_IN = 9                          # points(3) + view_dirs(3) + normals(3)
FEAT = 32                         # feature_vector_size
HIDDEN = 32                       # cfg.dims = [32, 32]
D_OUT = 3
DIMS = [D_IN + FEAT, HIDDEN, HIDDEN, D_OUT]   # [41, 32, 32, 3]

D0 = DIMS[0]                      # 41 (real input width; col 41 = bias column)
D0_PAD = 48                       # padded input width (bf16 sublane friendly)
D_OUT_PAD = 8                     # lane width of the kernel output (3 real cols)

ALIGN = 128                       # row-tile alignment
TM_MAX = 4096                     # row-tile ceiling (per perf review)
TARGET_STEPS = 8                  # aim for >= 8 grid steps, rounded to even


def _choose_tm(n):
    """Row tile: multiple of ALIGN, <= TM_MAX, targeting an even grid of >=
    TARGET_STEPS steps so both v7x TensorCores stay busy and row-padding waste
    is bounded."""
    if n <= 2 * ALIGN:
        return ALIGN
    steps = max(TARGET_STEPS, pl.cdiv(n, TM_MAX))
    steps += steps & 1                      # even number of grid steps
    tm = pl.cdiv(pl.cdiv(n, steps), ALIGN) * ALIGN
    return int(max(ALIGN, min(tm, TM_MAX)))


# ------------------------------ Pallas kernel ------------------------------
def _mlp_kernel(x_ref, w0_ref, w1_ref, b1_ref, w2_ref, b2_ref, o_ref):
    # Layer 0: Linear (+ bias folded into w0 via the bias column) + ReLU.
    x = x_ref[...]                                           # bf16 (tm, 48)
    h = jnp.dot(x, w0_ref[...], preferred_element_type=jnp.float32)
    h = jnp.maximum(h, 0.0)
    # Layer 1: Linear + ReLU (bf16 MXU operands, f32 accumulate / elementwise).
    h = jnp.dot(h.astype(jnp.bfloat16), w1_ref[...],
                preferred_element_type=jnp.float32)
    h = jnp.maximum(h + b1_ref[...], 0.0)
    # Layer 2: Linear + Sigmoid.
    h = jnp.dot(h.astype(jnp.bfloat16), w2_ref[...],
                preferred_element_type=jnp.float32)
    o_ref[...] = jax.nn.sigmoid(h + b2_ref[...]).astype(o_ref.dtype)


def _fused_mlp(x, w0, w1, b1, w2, b2, tm):
    n_pad, d0p = x.shape
    grid = (n_pad // tm,)
    row_in = pl.BlockSpec((tm, d0p), lambda i: (i, 0))
    row_out = pl.BlockSpec((tm, D_OUT_PAD), lambda i: (i, 0))

    def const_spec(arr):
        # Whole-array block, constant index map -> fetched once, stays resident.
        return pl.BlockSpec(arr.shape, lambda i: (0, 0))

    return pl.pallas_call(
        _mlp_kernel,
        out_shape=jax.ShapeDtypeStruct((n_pad, D_OUT_PAD), jnp.float32),
        grid_spec=pltpu.PrefetchScalarGridSpec(
            num_scalar_prefetch=0,
            grid=grid,
            in_specs=[row_in,
                      const_spec(w0),
                      const_spec(w1), const_spec(b1),
                      const_spec(w2), const_spec(b2)],
            out_specs=row_out,
        ),
        compiler_params=pltpu.CompilerParams(
            dimension_semantics=("parallel",)),
    )(x, w0, w1, b1, w2, b2)


# --------------------------- parameter handling -----------------------------
def init_params(key):
    """Deterministic weight-normed Linear params: v (out,in), g (out,), b (out,)."""
    params = []
    for l in range(len(DIMS) - 1):
        fan_in, fan_out = DIMS[l], DIMS[l + 1]
        key, k1, k2, k3 = jax.random.split(key, 4)
        bound = 1.0 / jnp.sqrt(fan_in)
        v = jax.random.uniform(k1, (fan_out, fan_in), jnp.float32, -bound, bound)
        g = 1.0 + 0.1 * jax.random.uniform(k2, (fan_out,), jnp.float32)
        b = jax.random.uniform(k3, (fan_out,), jnp.float32, -bound, bound)
        params.append((v, g, b))
    return params


def effective_weight(v, g):
    # PyTorch weight_norm (dim=0): w = g * v / ||v||, norm over input dim per row.
    norm = jnp.sqrt(jnp.sum(v * v, axis=1, keepdims=True))
    return (g[:, None] / norm) * v


def pack_weight(w_eff, in_pad, out_pad):
    """(out,in) effective weight -> zero-padded transposed (in_pad,out_pad) bf16."""
    fan_out, fan_in = w_eff.shape
    wt = jnp.zeros((in_pad, out_pad), jnp.float32)
    wt = wt.at[:fan_in, :fan_out].set(w_eff.T)
    return wt.astype(jnp.bfloat16)


def pack_bias(b, out_pad):
    bb = jnp.zeros((1, out_pad), jnp.float32)
    return bb.at[0, : b.shape[0]].set(b)


def pack_params(params):
    """Precompute weight-norm effective weights, pad/transpose, cast to bf16.
    Layer-0 bias is folded into row 41 of w0 (bias-column trick)."""
    (v0, g0, b0), (v1, g1, b1), (v2, g2, b2) = params
    w0_eff = effective_weight(v0, g0)                    # (32, 41)
    w0p = jnp.zeros((D0_PAD, HIDDEN), jnp.float32)
    w0p = w0p.at[:D0, :].set(w0_eff.T)
    w0p = w0p.at[D0, :].set(b0)                          # bias row
    return (w0p.astype(jnp.bfloat16),
            pack_weight(effective_weight(v1, g1), HIDDEN, HIDDEN),
            pack_bias(b1, HIDDEN),
            pack_weight(effective_weight(v2, g2), HIDDEN, D_OUT_PAD),
            pack_bias(b2, D_OUT_PAD))


# ------------------------------ module wrapper ------------------------------
@jax.jit
def rendering_net_forward(points, normals, view_dirs, feature_vectors,
                          w0, w1, b1, w2, b2):
    # mode == 'idr': rendering_input = cat([points, view_dirs, normals, feats], -1)
    rendering_input = jnp.concatenate(
        [points, view_dirs, normals, feature_vectors], axis=-1).astype(jnp.float32)
    n, d0 = rendering_input.shape
    tm = _choose_tm(n)
    n_pad = pl.cdiv(n, tm) * tm
    # Fused producer under jit: pad rows to tile multiple, cols 41 -> 48,
    # write 1.0 into the bias column (41), cast to bf16 -> single (n_pad, 48)
    # bf16 activation written to HBM once.
    x = jnp.pad(rendering_input, ((0, n_pad - n), (0, D0_PAD - d0)))
    x = x.at[:, D0].set(1.0)
    x = x.astype(jnp.bfloat16)
    out_pad = _fused_mlp(x, w0, w1, b1, w2, b2, tm)
    return out_pad[:n, :D_OUT]


# ------------------------------- references ---------------------------------
def reference_forward_f32(points, normals, view_dirs, feature_vectors, params):
    x = jnp.concatenate([points, view_dirs, normals, feature_vectors], axis=-1)
    for l, (v, g, b) in enumerate(params):
        w = effective_weight(v, g)
        x = x @ w.T + b
        if l < len(params) - 1:
            x = jnp.maximum(x, 0.0)
    return jax.nn.sigmoid(x)


def reference_forward_bf16(points, normals, view_dirs, feature_vectors, params):
    # Mirrors the kernel numerics: bf16 matmul operands, f32 accumulation,
    # layer-0 bias folded into an augmented matmul.
    x = jnp.concatenate([points, view_dirs, normals, feature_vectors],
                        axis=-1).astype(jnp.float32)
    (v0, g0, b0), (v1, g1, b1), (v2, g2, b2) = params
    ones = jnp.ones((x.shape[0], 1), jnp.float32)
    w0_aug = jnp.concatenate([effective_weight(v0, g0).T, b0[None, :]], axis=0)
    h = jnp.dot(jnp.concatenate([x, ones], axis=-1).astype(jnp.bfloat16),
                w0_aug.astype(jnp.bfloat16), preferred_element_type=jnp.float32)
    h = jnp.maximum(h, 0.0)
    h = jnp.dot(h.astype(jnp.bfloat16),
                effective_weight(v1, g1).T.astype(jnp.bfloat16),
                preferred_element_type=jnp.float32) + b1
    h = jnp.maximum(h, 0.0)
    h = jnp.dot(h.astype(jnp.bfloat16),
                effective_weight(v2, g2).T.astype(jnp.bfloat16),
                preferred_element_type=jnp.float32) + b2
    return jax.nn.sigmoid(h)


if __name__ == "__main__":
    key = jax.random.PRNGKey(0)
    kp, ki = jax.random.split(key)
    params = init_params(kp)
    w0, w1, b1, w2, b2 = pack_params(params)

    # small example inputs: 256 points
    num_points = 256
    k1, k2, k3, k4 = jax.random.split(ki, 4)
    points = jax.random.normal(k1, (num_points, 3), jnp.float32)
    normals = jax.random.normal(k2, (num_points, 3), jnp.float32)
    view_dirs = jax.random.normal(k3, (num_points, 3), jnp.float32)
    feature_vectors = jax.random.normal(k4, (num_points, FEAT), jnp.float32)

    out = rendering_net_forward(points, normals, view_dirs, feature_vectors,
                                w0, w1, b1, w2, b2)
    out = jax.block_until_ready(out)

    ref_bf16 = reference_forward_bf16(points, normals, view_dirs,
                                      feature_vectors, params)
    ref_f32 = reference_forward_f32(points, normals, view_dirs,
                                    feature_vectors, params)

    assert out.shape == (num_points, D_OUT), out.shape
    # Check against a reference with matching (bf16-operand) numerics.
    assert jnp.allclose(out, ref_bf16, atol=2e-3, rtol=0.0), \
        float(jnp.max(jnp.abs(out - ref_bf16)))
    # Semantic check against the pure-f32 PyTorch-equivalent forward.
    assert jnp.allclose(out, ref_f32, atol=2e-2, rtol=0.0), \
        float(jnp.max(jnp.abs(out - ref_f32)))

    # TODO(synk): modes 'idr_frame_encoding' / 'idr_pose*' (positional-encoded
    # view dirs, frame latent codes, lin_pose) only change the concatenated
    # input width; they would reuse the same fused-MLP kernel with a wider D0.
    print("KERNEL_OK")
</pallas_src>

<mosaic_0001>
module attributes {stable_mosaic.version = 11 : i64} {
  func.func @_mlp_kernel(%arg0: i32, %arg1: memref<128x48xbf16, #tpu.memory_space<vmem>>, %arg2: memref<48x32xbf16, #tpu.memory_space<vmem>>, %arg3: memref<32x32xbf16, #tpu.memory_space<vmem>>, %arg4: memref<1x32xf32, #tpu.memory_space<vmem>>, %arg5: memref<32x8xbf16, #tpu.memory_space<vmem>>, %arg6: memref<1x8xf32, #tpu.memory_space<vmem>>, %arg7: memref<128x8xf32, #tpu.memory_space<vmem>>) attributes {dimension_semantics = [#tpu.dimension_semantics<parallel>], iteration_bounds = array<i64: 2>, scalar_prefetch = 0 : i64, scratch_operands = 0 : i64, tpu.core_type = #tpu.core_type<tc>, window_params = [{transform_indices = @transform_0, window_bounds = array<i64: 128, 48>}, {pipeline_mode = #tpu.pipeline_mode<synchronous>, transform_indices = @transform_1, window_bounds = array<i64: 48, 32>}, {pipeline_mode = #tpu.pipeline_mode<synchronous>, transform_indices = @transform_2, window_bounds = array<i64: 32, 32>}, {pipeline_mode = #tpu.pipeline_mode<synchronous>, transform_indices = @transform_3, window_bounds = array<i64: 1, 32>}, {pipeline_mode = #tpu.pipeline_mode<synchronous>, transform_indices = @transform_4, window_bounds = array<i64: 32, 8>}, {pipeline_mode = #tpu.pipeline_mode<synchronous>, transform_indices = @transform_5, window_bounds = array<i64: 1, 8>}, {transform_indices = @transform_6, window_bounds = array<i64: 128, 8>}]} {
    %c0 = arith.constant 0 : index
    %c0_0 = arith.constant 0 : index
    %0 = vector.load %arg1[%c0, %c0_0] : memref<128x48xbf16, #tpu.memory_space<vmem>>, vector<128x48xbf16>
    %c0_1 = arith.constant 0 : index
    %c0_2 = arith.constant 0 : index
    %1 = vector.load %arg2[%c0_1, %c0_2] : memref<48x32xbf16, #tpu.memory_space<vmem>>, vector<48x32xbf16>
    %cst = arith.constant dense<0.000000e+00> : vector<128x32xf32>
    %2 = tpu.matmul %0, %1, %cst {dimension_numbers = #tpu.dot_dimension_numbers<[1], [0], [0], [1], [0, 0, 1, 1], [], []>} : vector<128x48xbf16>, vector<48x32xbf16>, vector<128x32xf32> -> vector<128x32xf32>
    %cst_3 = arith.constant 0.000000e+00 : f32
    %3 = vector.broadcast %cst_3 : f32 to vector<128x32xf32>
    %4 = arith.maximumf %2, %3 : vector<128x32xf32>
    %5 = arith.truncf %4 : vector<128x32xf32> to vector<128x32xbf16>
    %c0_4 = arith.constant 0 : index
    %c0_5 = arith.constant 0 : index
    %6 = vector.load %arg3[%c0_4, %c0_5] : memref<32x32xbf16, #tpu.memory_space<vmem>>, vector<32x32xbf16>
    %cst_6 = arith.constant dense<0.000000e+00> : vector<128x32xf32>
    %7 = tpu.matmul %5, %6, %cst_6 {dimension_numbers = #tpu.dot_dimension_numbers<[1], [0], [0], [1], [0, 0, 1, 1], [], []>} : vector<128x32xbf16>, vector<32x32xbf16>, vector<128x32xf32> -> vector<128x32xf32>
    %c0_7 = arith.constant 0 : index
    %c0_8 = arith.constant 0 : index
    %8 = vector.load %arg4[%c0_7, %c0_8] : memref<1x32xf32, #tpu.memory_space<vmem>>, vector<1x32xf32>
    %9 = vector.broadcast %8 : vector<1x32xf32> to vector<128x32xf32>
    %10 = arith.addf %7, %9 : vector<128x32xf32>
    %cst_9 = arith.constant 0.000000e+00 : f32
    %11 = vector.broadcast %cst_9 : f32 to vector<128x32xf32>
    %12 = arith.maximumf %10, %11 : vector<128x32xf32>
    %13 = arith.truncf %12 : vector<128x32xf32> to vector<128x32xbf16>
    %c0_10 = arith.constant 0 : index
    %c0_11 = arith.constant 0 : index
    %14 = vector.load %arg5[%c0_10, %c0_11] : memref<32x8xbf16, #tpu.memory_space<vmem>>, vector<32x8xbf16>
    %cst_12 = arith.constant dense<0.000000e+00> : vector<128x8xf32>
    %15 = tpu.matmul %13, %14, %cst_12 {dimension_numbers = #tpu.dot_dimension_numbers<[1], [0], [0], [1], [0, 0, 1, 1], [], []>} : vector<128x32xbf16>, vector<32x8xbf16>, vector<128x8xf32> -> vector<128x8xf32>
    %c0_13 = arith.constant 0 : index
    %c0_14 = arith.constant 0 : index
    %16 = vector.load %arg6[%c0_13, %c0_14] : memref<1x8xf32, #tpu.memory_space<vmem>>, vector<1x8xf32>
    %17 = vector.broadcast %16 : vector<1x8xf32> to vector<128x8xf32>
    %18 = arith.addf %15, %17 : vector<128x8xf32>
    %19 = arith.negf %18 : vector<128x8xf32>
    %20 = math.exp %19 : vector<128x8xf32>
    %cst_15 = arith.constant 1.000000e+00 : f32
    %21 = vector.broadcast %cst_15 : f32 to vector<128x8xf32>
    %22 = arith.addf %21, %20 : vector<128x8xf32>
    %23 = arith.divf %21, %22 : vector<128x8xf32>
    %c0_16 = arith.constant 0 : index
    %c0_17 = arith.constant 0 : index
    %24 = vector.load %arg7[%c0_16, %c0_17] : memref<128x8xf32, #tpu.memory_space<vmem>>, vector<128x8xf32>
    tpu.vector_store %arg7[%c0_16, %c0_17], %23 {strides = array<i32>} : memref<128x8xf32, #tpu.memory_space<vmem>>, vector<128x8xf32>,
    return
  }
  func.func @transform_0(%arg0: i32) -> (i32, i32) {
    %c0_i32 = arith.constant 0 : i32
    %c0_i32_0 = arith.constant 0 : i32
    return %arg0, %c0_i32 : i32, i32
  }
  func.func @transform_1(%arg0: i32) -> (i32, i32) {
    %c0_i32 = arith.constant 0 : i32
    %c0_i32_0 = arith.constant 0 : i32
    %c0_i32_1 = arith.constant 0 : i32
    return %c0_i32, %c0_i32_0 : i32, i32
  }
  func.func @transform_2(%arg0: i32) -> (i32, i32) {
    %c0_i32 = arith.constant 0 : i32
    %c0_i32_0 = arith.constant 0 : i32
    %c0_i32_1 = arith.constant 0 : i32
    return %c0_i32, %c0_i32_0 : i32, i32
  }
  func.func @transform_3(%arg0: i32) -> (i32, i32) {
    %c0_i32 = arith.constant 0 : i32
    %c0_i32_0 = arith.constant 0 : i32
    %c0_i32_1 = arith.constant 0 : i32
    return %c0_i32, %c0_i32_0 : i32, i32
  }
  func.func @transform_4(%arg0: i32) -> (i32, i32) {
    %c0_i32 = arith.constant 0 : i32
    %c0_i32_0 = arith.constant 0 : i32
    %c0_i32_1 = arith.constant 0 : i32
    return %c0_i32, %c0_i32_0 : i32, i32
  }
  func.func @transform_5(%arg0: i32) -> (i32, i32) {
    %c0_i32 = arith.constant 0 : i32
    %c0_i32_0 = arith.constant 0 : i32
    %c0_i32_1 = arith.constant 0 : i32
    return %c0_i32, %c0_i32_0 : i32, i32
  }
  func.func @transform_6(%arg0: i32) -> (i32, i32) {
    %c0_i32 = arith.constant 0 : i32
    %c0_i32_0 = arith.constant 0 : i32
    return %arg0, %c0_i32 : i32, i32
  }
}

</mosaic_0001>

<llo_original>
// kernel: rendering_net_forward.1
$region0: #{rendering_net_forward.1}
  #allocation0 [shape = 'u32[]', space=smem, size = 0x4, offset = 0x4, fixed_abs, tag = 'smem constant byte address 0x4 - core index']
  #allocation1 [shape = 'u32[144,128]{1,0:T(1,128)}', space=vmem, size = 0x12000, scoped, tag = 'internal scratch']
  %s0 = inlined_call_operand.vmem [shape: bf16[256,48], index: 0, kind: input, shape index: {}]
  %s1 = inlined_call_operand.vmem [shape: bf16[48,32], index: 1, kind: input, shape index: {}]
  %s2 = inlined_call_operand.vmem [shape: bf16[32,32], index: 2, kind: input, shape index: {}]
  %s3 = inlined_call_operand.vmem [shape: f32[1,32], index: 3, kind: input, shape index: {}]
  %s4 = inlined_call_operand.vmem [shape: bf16[32,8], index: 4, kind: input, shape index: {}]
  %s5 = inlined_call_operand.vmem [shape: f32[1,8], index: 5, kind: input, shape index: {}]
  %s6 = inlined_call_operand.vmem [shape: f32[256,8], index: 6, kind: output, shape index: {}]
  %s7 = sld [smem:[#allocation0]]
  $region57: #{rendering_net_forward.1} parent=0
    _
  %s9 = ssub.s32 1, %s7
  %s10 = scalar_select 0, %s9, %s7
  loop: start=0, step=1, limit=4
  $region2: #{rendering_net_forward.1} parent=0 // loop_pre_header
    _
  $region3: #{rendering_net_forward.1} parent=0 // loop_header
    %s12 = sphi 0, %s16
    %p13 = scmp.ge.s32.totalorder %s12, 4
    %s22 = sphi 0, %s24
    %s25 = sphi 0, %s22
    %s26 = sphi 0, %s25
    %s42 = sphi 0, %s26
    %s46 = sphi 0, %s46
    %s48 = sphi 0, %s46
    %s49 = sphi 0, %s48
    %s63 = sphi 0, %s49
    %s67 = sphi 0, %s67
    %s69 = sphi 0, %s67
    %s70 = sphi 0, %s69
    %s84 = sphi 0, %s70
    %s88 = sphi 0, %s88
    %s90 = sphi 0, %s88
    %s91 = sphi 0, %s90
    %s105 = sphi 0, %s91
    %s109 = sphi 0, %s109
    %s111 = sphi 0, %s109
    %s112 = sphi 0, %s111
    %s126 = sphi 0, %s112
    %s130 = sphi 0, %s130
    %s132 = sphi 0, %s130
    %s133 = sphi 0, %s132
    %s147 = sphi 0, %s133
    %s153 = sphi 0, %s155
    %s156 = sphi 0, %s153
    %s157 = sphi 0, %s156
    %s173 = sphi 0, %s157
  $region4: #{rendering_net_forward.1} parent=0 // loop_header_branch
    %15 = sbr.rel (%p13) target = $region8
  $region5: #{rendering_net_forward.1} parent=0 // loop_body
    %s17 = ssub.s32 %s12, 1
    %s18 = ssub.s32 %s12, 2
    %s19 = sadd.s32 %s12, 1
    %s20 = ssub.s32 %s12, %s19
    %p21 = scmp.eq.s32.totalorder %s20, 0
    %s23 = sadd.s32 %s22, 1
    %s24 = scalar_select %p21, %s22, %s23
    %p27 = pneg %p21
    %p28 = scmp.eq.s32.totalorder %s12, 1
    %p29 = por %p27, %p28
    %p30 = scmp.ne.s32.totalorder %s22, %s25
    %p31 = scmp.eq.s32.totalorder %s12, 0
    %p32 = por %p30, %p31
    %p33 = scmp.ne.s32.totalorder %s22, %s25
    %p34 = scmp.eq.s32.totalorder %s17, 1
    %p35 = por %p33, %p34
    %p36 = scmp.ne.s32.totalorder %s25, %s26
    %p37 = scmp.eq.s32.totalorder %s17, 0
    %p38 = por %p36, %p37
    %p39 = scmp.ne.s32.totalorder %s25, %s26
    %p40 = scmp.eq.s32.totalorder %s18, 1
    %p41 = por %p39, %p40
    %p43 = scmp.ne.s32.totalorder %s26, %s42
    %p44 = scmp.eq.s32.totalorder %s18, 0
    %p45 = por %p43, %p44
    %s47 = sadd.s32 %s46, 1
    %p50 = scmp.eq.s32.totalorder %s12, 1
    %p51 = scmp.ne.s32.totalorder %s46, %s48
    %p52 = scmp.eq.s32.totalorder %s12, 0
    %p53 = por %p51, %p52
    %p54 = scmp.ne.s32.totalorder %s46, %s48
    %p55 = scmp.eq.s32.totalorder %s17, 1
    %p56 = por %p54, %p55
    %p57 = scmp.ne.s32.totalorder %s48, %s49
    %p58 = scmp.eq.s32.totalorder %s17, 0
    %p59 = por %p57, %p58
    %p60 = scmp.ne.s32.totalorder %s48, %s49
    %p61 = scmp.eq.s32.totalorder %s18, 1
    %p62 = por %p60, %p61
    %p64 = scmp.ne.s32.totalorder %s49, %s63
    %p65 = scmp.eq.s32.totalorder %s18, 0
    %p66 = por %p64, %p65
    %s68 = sadd.s32 %s67, 1
    %p71 = scmp.eq.s32.totalorder %s12, 1
    %p72 = scmp.ne.s32.totalorder %s67, %s69
    %p73 = scmp.eq.s32.totalorder %s12, 0
    %p74 = por %p72, %p73
    %p75 = scmp.ne.s32.totalorder %s67, %s69
    %p76 = scmp.eq.s32.totalorder %s17, 1
    %p77 = por %p75, %p76
    %p78 = scmp.ne.s32.totalorder %s69, %s70
    %p79 = scmp.eq.s32.totalorder %s17, 0
    %p80 = por %p78, %p79
    %p81 = scmp.ne.s32.totalorder %s69, %s70
    %p82 = scmp.eq.s32.totalorder %s18, 1
    %p83 = por %p81, %p82
    %p85 = scmp.ne.s32.totalorder %s70, %s84
    %p86 = scmp.eq.s32.totalorder %s18, 0
    %p87 = por %p85, %p86
    %s89 = sadd.s32 %s88, 1
    %p92 = scmp.eq.s32.totalorder %s12, 1
    %p93 = scmp.ne.s32.totalorder %s88, %s90
    %p94 = scmp.eq.s32.totalorder %s12, 0
    %p95 = por %p93, %p94
    %p96 = scmp.ne.s32.totalorder %s88, %s90
    %p97 = scmp.eq.s32.totalorder %s17, 1
    %p98 = por %p96, %p97
    %p99 = scmp.ne.s32.totalorder %s90, %s91
    %p100 = scmp.eq.s32.totalorder %s17, 0
    %p101 = por %p99, %p100
    %p102 = scmp.ne.s32.totalorder %s90, %s91
    %p103 = scmp.eq.s32.totalorder %s18, 1
    %p104 = por %p102, %p103
    %p106 = scmp.ne.s32.totalorder %s91, %s105
    %p107 = scmp.eq.s32.totalorder %s18, 0
    %p108 = por %p106, %p107
    %s110 = sadd.s32 %s109, 1
    %p113 = scmp.eq.s32.totalorder %s12, 1
    %p114 = scmp.ne.s32.totalorder %s109, %s111
    %p115 = scmp.eq.s32.totalorder %s12, 0
    %p116 = por %p114, %p115
    %p117 = scmp.ne.s32.totalorder %s109, %s111
    %p118 = scmp.eq.s32.totalorder %s17, 1
    %p119 = por %p117, %p118
    %p120 = scmp.ne.s32.totalorder %s111, %s112
    %p121 = scmp.eq.s32.totalorder %s17, 0
    %p122 = por %p120, %p121
    %p123 = scmp.ne.s32.totalorder %s111, %s112
    %p124 = scmp.eq.s32.totalorder %s18, 1
    %p125 = por %p123, %p124
    %p127 = scmp.ne.s32.totalorder %s112, %s126
    %p128 = scmp.eq.s32.totalorder %s18, 0
    %p129 = por %p127, %p128
    %s131 = sadd.s32 %s130, 1
    %p134 = scmp.eq.s32.totalorder %s12, 1
    %p135 = scmp.ne.s32.totalorder %s130, %s132
    %p136 = scmp.eq.s32.totalorder %s12, 0
    %p137 = por %p135, %p136
    %p138 = scmp.ne.s32.totalorder %s130, %s132
    %p139 = scmp.eq.s32.totalorder %s17, 1
    %p140 = por %p138, %p139
    %p141 = scmp.ne.s32.totalorder %s132, %s133
    %p142 = scmp.eq.s32.totalorder %s17, 0
    %p143 = por %p141, %p142
    %p144 = scmp.ne.s32.totalorder %s132, %s133
    %p145 = scmp.eq.s32.totalorder %s18, 1
    %p146 = por %p144, %p145
    %p148 = scmp.ne.s32.totalorder %s133, %s147
    %p149 = scmp.eq.s32.totalorder %s18, 0
    %p150 = por %p148, %p149
    %s151 = ssub.s32 %s12, %s19
    %p152 = scmp.eq.s32.totalorder %s151, 0
    %s154 = sadd.s32 %s153, 1
    %s155 = scalar_select %p152, %s153, %s154
    %p158 = pneg %p152
    %p159 = scmp.eq.s32.totalorder %s12, 1
    %p160 = por %p158, %p159
    %p161 = scmp.ne.s32.totalorder %s153, %s156
    %p162 = scmp.eq.s32.totalorder %s12, 0
    %p163 = por %p161, %p162
    %p164 = scmp.ne.s32.totalorder %s153, %s156
    %p165 = scmp.eq.s32.totalorder %s17, 1
    %p166 = por %p164, %p165
    %p167 = scmp.ne.s32.totalorder %s156, %s157
    %p168 = scmp.eq.s32.totalorder %s17, 0
    %p169 = por %p167, %p168
    %p170 = scmp.ne.s32.totalorder %s156, %s157
    %p171 = scmp.eq.s32.totalorder %s18, 1
    %p172 = por %p170, %p171
    %p174 = scmp.ne.s32.totalorder %s157, %s173
    %p175 = scmp.eq.s32.totalorder %s18, 0
    %p176 = por %p174, %p175
    %p177 = scmp.le.s32.totalorder 1, %s12
    %p178 = scmp.lt.s32.totalorder %s12, 3
    %p179 = pnand %p177, %p178
    %p180 = pneg %p179
    // Predicated region
    $region9: #{rendering_net_forward.1} parent=5 // pred_check
      _
    $region10: #{rendering_net_forward.1} parent=5 // pred_check_branch
      %182 = sbr.rel (%p179) target = $region12
    $region11: #{rendering_net_forward.1} parent=5 // pred_region
      %s183 = ssub.s32 %s12, 1
      // Predicated region
      $region13: #{rendering_net_forward.1} parent=11 // pred_check
        %p184 = pneg %p59
      $region14: #{rendering_net_forward.1} parent=11 // pred_check_branch
        %186 = sbr.rel (%p184) target = $region16
      $region15: #{rendering_net_forward.1} parent=11 // pred_region
        _
      $region16: #{rendering_net_forward.1} parent=11 // pred_fallthru
        _
      // Predicated region
      $region17: #{rendering_net_forward.1} parent=11 // pred_check
        %p187 = pneg %p80
      $region18: #{rendering_net_forward.1} parent=11 // pred_check_branch
        %189 = sbr.rel (%p187) target = $region20
      $region19: #{rendering_net_forward.1} parent=11 // pred_region
        _
      $region20: #{rendering_net_forward.1} parent=11 // pred_fallthru
        _
      // Predicated region
      $region21: #{rendering_net_forward.1} parent=11 // pred_check
        %p190 = pneg %p101
      $region22: #{rendering_net_forward.1} parent=11 // pred_check_branch
        %192 = sbr.rel (%p190) target = $region24
      $region23: #{rendering_net_forward.1} parent=11 // pred_region
        _
      $region24: #{rendering_net_forward.1} parent=11 // pred_fallthru
        _
      // Predicated region
      $region25: #{rendering_net_forward.1} parent=11 // pred_check
        %p193 = pneg %p122
      $region26: #{rendering_net_forward.1} parent=11 // pred_check_branch
        %195 = sbr.rel (%p193) target = $region28
      $region27: #{rendering_net_forward.1} parent=11 // pred_region
        _
      $region28: #{rendering_net_forward.1} parent=11 // pred_fallthru
        _
      // Predicated region
      $region29: #{rendering_net_forward.1} parent=11 // pred_check
        %p196 = pneg %p143
      $region30: #{rendering_net_forward.1} parent=11 // pred_check_branch
        %198 = sbr.rel (%p196) target = $region32
      $region31: #{rendering_net_forward.1} parent=11 // pred_region
        _
      $region32: #{rendering_net_forward.1} parent=11 // pred_fallthru
        _
    $region12: #{rendering_net_forward.1} parent=5 // pred_fallthru
      _
    %p199 = scmp.lt.s32.totalorder %s12, 2
    // Predicated region
    $region33: #{rendering_net_forward.1} parent=5 // pred_check
      %p200 = pneg %p199
    $region34: #{rendering_net_forward.1} parent=5 // pred_check_branch
      %202 = sbr.rel (%p200) target = $region36
    $region35: #{rendering_net_forward.1} parent=5 // pred_region
      // Predicated region
      $region37: #{rendering_net_forward.1} parent=35 // pred_check
        %p203 = pneg %p32
      $region38: #{rendering_net_forward.1} parent=35 // pred_check_branch
        %205 = sbr.rel (%p203) target = $region40
      $region39: #{rendering_net_forward.1} parent=35 // pred_region
        %s206 = smul.u32 16, %s12
        %p207 = scmp.lt.s32.totalorder %s206, 31
        %s208 = scalar_select %p207, %s206, 31
        %s209 = smul.addr %s208, 4
        %s210 = scalar_lea.vmem %s0, %s209
        %s211 = smul.u32 16, %s12
      $region40: #{rendering_net_forward.1} parent=35 // pred_fallthru
        _
    $region36: #{rendering_net_forward.1} parent=5 // pred_fallthru
      _
    %p212 = scmp.le.s32.totalorder 1, %s12
    %p213 = scmp.lt.s32.totalorder %s12, 3
    %p214 = pnand %p212, %p213
    %p215 = pneg %p214
    // Predicated region
    $region41: #{rendering_net_forward.1} parent=5 // pred_check
      _
    $region42: #{rendering_net_forward.1} parent=5 // pred_check_branch
      %217 = sbr.rel (%p214) target = $region44
    $region43: #{rendering_net_forward.1} parent=5 // pred_region
      %s218 = ssub.s32 %s12, 1
      %s219 = smul.u32 16, %s17
      %p220 = scmp.lt.s32.totalorder %s219, 31
      %s221 = scalar_select %p220, %s219, 31
      %s222 = smul.addr %s221, 4
      %s223 = scalar_lea.vmem %s0, %s222
      %p224 = pneg %p38
      %p225 = pneg %p35
      %p226 = pneg %p59
      %p227 = pneg %p56
      %p228 = pneg %p80
      %p229 = pneg %p77
      %p230 = pneg %p101
      %p231 = pneg %p98
      %p232 = pneg %p122
      %p233 = pneg %p119
      %p234 = pneg %p143
      %p235 = pneg %p140
      %p236 = pneg %p169
      %p237 = pneg %p166
      %s238 = smul.u32 16, %s17
      %p239 = scmp.lt.s32.totalorder %s238, 31
      %s240 = scalar_select %p239, %s238, 31
      %s241 = smul.addr %s240, 8
      %s242 = scalar_lea.vmem %s6, %s241
      %s243 = smul.u32 16, %s17
      %p244 = scmp.lt.s32.totalorder %s243, 31
      %s245 = scalar_select %p244, %s243, 31
      %s246 = smul.addr %s245, 4
      %s247 = scalar_lea.vmem %s0, %s246
      %s248 = smul.u32 16, %s17
      %s249 = smul.u32 16, %s17
      %p250 = scmp.lt.s32.totalorder %s249, 31
      %s251 = scalar_select %p250, %s249, 31
      %s252 = smul.addr %s251, 8
      %s253 = scalar_lea.vmem %s6, %s252
      %s254 = smul.u32 16, %s17
      %v256 = vld [vmem:[%s247] sm:$0xf]
      %v257 = vld [vmem:[%s247 + $0x4] sm:$0xf]
      %v258 = vld [vmem:[%s247 + $0x8] sm:$0xf]
      %v259 = vld [vmem:[%s247 + $0xc] sm:$0xf]
      %v260 = vld [vmem:[%s247 + $0x10] sm:$0xf]
      %v261 = vld [vmem:[%s247 + $0x14] sm:$0xf]
      %v262 = vld [vmem:[%s247 + $0x18] sm:$0xf]
      %v263 = vld [vmem:[%s247 + $0x1c] sm:$0xf]
      %v264 = vld [vmem:[%s247 + $0x20] sm:$0xf]
      %v265 = vld [vmem:[%s247 + $0x24] sm:$0xf]
      %v266 = vld [vmem:[%s247 + $0x28] sm:$0xf]
      %v267 = vld [vmem:[%s247 + $0x2c] sm:$0xf]
      %v268 = vld [vmem:[%s247 + $0x30] sm:$0xf]
      %v269 = vld [vmem:[%s247 + $0x34] sm:$0xf]
      %v270 = vld [vmem:[%s247 + $0x38] sm:$0xf]
      %v271 = vld [vmem:[%s247 + $0x3c] sm:$0xf]
      %v272 = vld [vmem:[%s1] sm:$0xf]
      %v273 = vld [vmem:[%s1 + $0x4] sm:$0xf]
      %v274 = vld [vmem:[%s1 + $0x8] sm:$0xf]
      %v275 = vld [vmem:[%s1 + $0xc] sm:$0xf]
      %v276 = vld [vmem:[%s1 + $0x10] sm:$0xf]
      %v277 = vld [vmem:[%s1 + $0x14] sm:$0xf]
      %v294 = vunpack.c.l.b16 %v256
      %v295 = vunpack.c.l.b16 %v257
      %v296 = vunpack.c.l.b16 %v258
      %v297 = vunpack.c.l.b16 %v259
      %v298 = vunpack.c.l.b16 %v260
      %v299 = vunpack.c.l.b16 %v261
      %v300 = vunpack.c.l.b16 %v262
      %v301 = vunpack.c.l.b16 %v263
      %v302 = vunpack.c.l.b16 %v264
      %v303 = vunpack.c.l.b16 %v265
      %v304 = vunpack.c.l.b16 %v266
      %v305 = vunpack.c.l.b16 %v267
      %v306 = vunpack.c.l.b16 %v268
      %v307 = vunpack.c.l.b16 %v269
      %v308 = vunpack.c.l.b16 %v270
      %v309 = vunpack.c.l.b16 %v271
      %v310 = vpack.c.b16 %v295, %v294
      %v311 = vpack.c.b16 %v297, %v296
      %v312 = vpack.c.b16 %v299, %v298
      %v313 = vpack.c.b16 %v301, %v300
      %v314 = vpack.c.b16 %v303, %v302
      %v315 = vpack.c.b16 %v305, %v304
      %v316 = vpack.c.b16 %v307, %v306
      %v317 = vpack.c.b16 %v309, %v308
      %v324 = vunpack.c.l.b16 %v272
      %v325 = vunpack.c.l.b16 %v273
      %v326 = vunpack.c.l.b16 %v274
      %v327 = vunpack.c.l.b16 %v275
      %v328 = vunpack.c.l.b16 %v276
      %v329 = vunpack.c.l.b16 %v277
      %v330 = vpack.c.b16 %v325, %v324
      %v331 = vpack.c.b16 %v327, %v326
      %v332 = vpack.c.b16 %v329, %v328
      %vm336 = vcmask 392192
      %v338 = vsel %vm336, %v310, 0
      %v341 = vsel %vm336, %v311, 0
      %v344 = vsel %vm336, %v312, 0
      %v347 = vsel %vm336, %v313, 0
      %v350 = vsel %vm336, %v314, 0
      %v353 = vsel %vm336, %v315, 0
      %v356 = vsel %vm336, %v316, 0
      %v359 = vsel %vm336, %v317, 0
      %361 = vmatprep.subr.bf16.mxu0 0
      %362 = vmatpush1.bf16.msra.mxu0 %v330
      %363 = vmatprep.subr.bf16.mxu0 0
      %364 = vmatpush1.bf16.msra.mxu0 %v331
      %365 = vmatprep.subr.bf16.mxu0 0
      %366 = vmatpush1.bf16.msra.mxu0 %v332
      %367 = vmatprep.subr.bf16.mxu0 0
      %368 = vmatpush1.bf16.msra.mxu0 0
      %369 = vmatprep.subr.bf16.mxu0 0
      %370 = vmatpush1.bf16.msra.mxu0 0
      %371 = vmatprep.subr.bf16.mxu0 0
      %372 = vmatpush1.bf16.msra.mxu0 0
      %373 = vmatprep.subr.bf16.mxu0 0
      %374 = vmatpush1.bf16.msra.mxu0 0
      %375 = vmatprep.subr.bf16.mxu0 0
      %376 = vmatpush1.bf16.msra.mxu0 0
      %377 = vmatprep.subr.bf16.mxu0 0
      %378 = vmatpush1.bf16.msra.mxu0 0
      %379 = vmatprep.subr.bf16.mxu0 0
      %380 = vmatpush1.bf16.msra.mxu0 0
      %381 = vmatprep.subr.bf16.mxu0 0
      %382 = vmatpush1.bf16.msra.mxu0 0
      %383 = vmatprep.subr.bf16.mxu0 0
      %384 = vmatpush1.bf16.msra.mxu0 0
      %385 = vmatprep.subr.bf16.mxu0 0
      %386 = vmatpush1.bf16.msra.mxu0 0
      %387 = vmatprep.subr.bf16.mxu0 0
      %388 = vmatpush1.bf16.msra.mxu0 0
      %389 = vmatprep.subr.bf16.mxu0 0
      %390 = vmatpush1.bf16.msra.mxu0 0
      %391 = vmatprep.subr.bf16.mxu0 0
      %392 = vmatpush1.bf16.msra.mxu0 0
      %393 = vmatprep.mubr.bf16.mxu0 0
      %394 = vmatmul.mubr.bf16.gmra.mrb[0].mxu0 %v338
      %v395 = vpop.f32.mrb[0].mxu0
      %v396 = vadd.f32 0.0, %v395
      %v397 = vpop.f32.mrb[0].mxu0
      %v398 = vpop.f32.mrb[0].mxu0
      %v399 = vadd.f32 0.0, %v398
      %v400 = vpop.f32.mrb[0].mxu0
      %401 = vmatprep.mubr.bf16.mxu0 0
      %402 = vmatmul.mubr.bf16.gmra.mrb[0].mxu0 %v341
      %v403 = vpop.f32.mrb[0].mxu0
      %v404 = vadd.f32 0.0, %v403
      %v405 = vpop.f32.mrb[0].mxu0
      %v406 = vpop.f32.mrb[0].mxu0
      %v407 = vadd.f32 0.0, %v406
      %v408 = vpop.f32.mrb[0].mxu0
      %409 = vmatprep.mubr.bf16.mxu0 0
      %410 = vmatmul.mubr.bf16.gmra.mrb[0].mxu0 %v344
      %v411 = vpop.f32.mrb[0].mxu0
      %v412 = vadd.f32 0.0, %v411
      %v413 = vpop.f32.mrb[0].mxu0
      %v414 = vpop.f32.mrb[0].mxu0
      %v415 = vadd.f32 0.0, %v414
      %v416 = vpop.f32.mrb[0].mxu0
      %417 = vmatprep.mubr.bf16.mxu0 0
      %418 = vmatmul.mubr.bf16.gmra.mrb[0].mxu0 %v347
      %v419 = vpop.f32.mrb[0].mxu0
      %v420 = vadd.f32 0.0, %v419
      %v421 = vpop.f32.mrb[0].mxu0
      %v422 = vpop.f32.mrb[0].mxu0
      %v423 = vadd.f32 0.0, %v422
      %v424 = vpop.f32.mrb[0].mxu0
      %425 = vmatprep.mubr.bf16.mxu0 0
      %426 = vmatmul.mubr.bf16.gmra.mrb[0].mxu0 %v350
      %v427 = vpop.f32.mrb[0].mxu0
      %v428 = vadd.f32 0.0, %v427
      %v429 = vpop.f32.mrb[0].mxu0
      %v430 = vpop.f32.mrb[0].mxu0
      %v431 = vadd.f32 0.0, %v430
      %v432 = vpop.f32.mrb[0].mxu0
      %433 = vmatprep.mubr.bf16.mxu0 0
      %434 = vmatmul.mubr.bf16.gmra.mrb[0].mxu0 %v353
      %v435 = vpop.f32.mrb[0].mxu0
      %v436 = vadd.f32 0.0, %v435
      %v437 = vpop.f32.mrb[0].mxu0
      %v438 = vpop.f32.mrb[0].mxu0
      %v439 = vadd.f32 0.0, %v438
      %v440 = vpop.f32.mrb[0].mxu0
      %441 = vmatprep.mubr.bf16.mxu0 0
      %442 = vmatmul.mubr.bf16.gmra.mrb[0].mxu0 %v356
      %v443 = vpop.f32.mrb[0].mxu0
      %v444 = vadd.f32 0.0, %v443
      %v445 = vpop.f32.mrb[0].mxu0
      %v446 = vpop.f32.mrb[0].mxu0
      %v447 = vadd.f32 0.0, %v446
      %v448 = vpop.f32.mrb[0].mxu0
      %449 = vmatprep.mubr.bf16.mxu0 0
      %450 = vmatmul.mubr.bf16.gmra.mrb[0].mxu0 %v359
      %v451 = vpop.f32.mrb[0].mxu0
      %v452 = vadd.f32 0.0, %v451
      %v453 = vpop.f32.mrb[0].mxu0
      %v454 = vpop.f32.mrb[0].mxu0
      %v455 = vadd.f32 0.0, %v454
      %v456 = vpop.f32.mrb[0].mxu0
      %457 = vdwg.mxu0
      %v458 = vmax.f32 %v396, 0.0
      %v459 = vmax.f32 %v399, 0.0
      %v460 = vmax.f32 %v404, 0.0
      %v461 = vmax.f32 %v407, 0.0
      %v462 = vmax.f32 %v412, 0.0
      %v463 = vmax.f32 %v415, 0.0
      %v464 = vmax.f32 %v420, 0.0
      %v465 = vmax.f32 %v423, 0.0
      %v466 = vmax.f32 %v428, 0.0
      %v467 = vmax.f32 %v431, 0.0
      %v468 = vmax.f32 %v436, 0.0
      %v469 = vmax.f32 %v439, 0.0
      %v470 = vmax.f32 %v444, 0.0
      %v471 = vmax.f32 %v447, 0.0
      %v472 = vmax.f32 %v452, 0.0
      %v473 = vmax.f32 %v455, 0.0
      %v474 = vpack.c.bf16 %v459, %v458
      %v475 = vpack.c.bf16 %v461, %v460
      %v476 = vpack.c.bf16 %v463, %v462
      %v477 = vpack.c.bf16 %v465, %v464
      %v478 = vpack.c.bf16 %v467, %v466
      %v479 = vpack.c.bf16 %v469, %v468
      %v480 = vpack.c.bf16 %v471, %v470
      %v481 = vpack.c.bf16 %v473, %v472
      %v482 = vld [vmem:[%s2] sm:$0xf]
      %v483 = vld [vmem:[%s2 + $0x4] sm:$0xf]
      %v484 = vld [vmem:[%s2 + $0x8] sm:$0xf]
      %v485 = vld [vmem:[%s2 + $0xc] sm:$0xf]
      %v486 = vld [vmem:[%s3] sm:$0x1]
      %v488 = vlaneseq
      %v489 = vshrl.u32 %v488, 7
      %v490 = vsub.s32 0, %v489
      %v491 = vrot.slane %v486, %v490
      %v497 = vunpack.c.l.b16 %v482
      %v498 = vunpack.c.l.b16 %v483
      %v499 = vunpack.c.l.b16 %v484
      %v500 = vunpack.c.l.b16 %v485
      %v501 = vpack.c.b16 %v498, %v497
      %v502 = vpack.c.b16 %v500, %v499
      %vm505 = vcmask 261120
      %v507 = vsel %vm505, %v474, 0
      %v510 = vsel %vm505, %v475, 0
      %v513 = vsel %vm505, %v476, 0
      %v516 = vsel %vm505, %v477, 0
      %v519 = vsel %vm505, %v478, 0
      %v522 = vsel %vm505, %v479, 0
      %v525 = vsel %vm505, %v480, 0
      %v528 = vsel %vm505, %v481, 0
      %530 = vmatprep.subr.bf16.mxu0 0
      %531 = vmatpush1.bf16.msra.mxu0 %v501
      %532 = vmatprep.subr.bf16.mxu0 0
      %533 = vmatpush1.bf16.msra.mxu0 %v502
      %534 = vmatprep.subr.bf16.mxu0 0
      %535 = vmatpush1.bf16.msra.mxu0 0
      %536 = vmatprep.subr.bf16.mxu0 0
      %537 = vmatpush1.bf16.msra.mxu0 0
      %538 = vmatprep.subr.bf16.mxu0 0
      %539 = vmatpush1.bf16.msra.mxu0 0
      %540 = vmatprep.subr.bf16.mxu0 0
      %541 = vmatpush1.bf16.msra.mxu0 0
      %542 = vmatprep.subr.bf16.mxu0 0
      %543 = vmatpush1.bf16.msra.mxu0 0
      %544 = vmatprep.subr.bf16.mxu0 0
      %545 = vmatpush1.bf16.msra.mxu0 0
      %546 = vmatprep.subr.bf16.mxu0 0
      %547 = vmatpush1.bf16.msra.mxu0 0
      %548 = vmatprep.subr.bf16.mxu0 0
      %549 = vmatpush1.bf16.msra.mxu0 0
      %550 = vmatprep.subr.bf16.mxu0 0
      %551 = vmatpush1.bf16.msra.mxu0 0
      %552 = vmatprep.subr.bf16.mxu0 0
      %553 = vmatpush1.bf16.msra.mxu0 0
      %554 = vmatprep.subr.bf16.mxu0 0
      %555 = vmatpush1.bf16.msra.mxu0 0
      %556 = vmatprep.subr.bf16.mxu0 0
      %557 = vmatpush1.bf16.msra.mxu0 0
      %558 = vmatprep.subr.bf16.mxu0 0
      %559 = vmatpush1.bf16.msra.mxu0 0
      %560 = vmatprep.subr.bf16.mxu0 0
      %561 = vmatpush1.bf16.msra.mxu0 0
      %562 = vmatprep.mubr.bf16.mxu0 0
      %563 = vmatmul.mubr.bf16.gmra.mrb[0].mxu0 %v507
      %v564 = vpop.f32.mrb[0].mxu0
      %v565 = vadd.f32 %v491, %v564
      %v566 = vpop.f32.mrb[0].mxu0
      %v567 = vpop.f32.mrb[0].mxu0
      %v568 = vadd.f32 %v491, %v567
      %v569 = vpop.f32.mrb[0].mxu0
      %570 = vmatprep.mubr.bf16.mxu0 0
      %571 = vmatmul.mubr.bf16.gmra.mrb[0].mxu0 %v510
      %v572 = vpop.f32.mrb[0].mxu0
      %v573 = vadd.f32 %v491, %v572
      %v574 = vpop.f32.mrb[0].mxu0
      %v575 = vpop.f32.mrb[0].mxu0
      %v576 = vadd.f32 %v491, %v575
      %v577 = vpop.f32.mrb[0].mxu0
      %578 = vmatprep.mubr.bf16.mxu0 0
      %579 = vmatmul.mubr.bf16.gmra.mrb[0].mxu0 %v513
      %v580 = vpop.f32.mrb[0].mxu0
      %v581 = vadd.f32 %v491, %v580
      %v582 = vpop.f32.mrb[0].mxu0
      %v583 = vpop.f32.mrb[0].mxu0
      %v584 = vadd.f32 %v491, %v583
      %v585 = vpop.f32.mrb[0].mxu0
      %586 = vmatprep.mubr.bf16.mxu0 0
      %587 = vmatmul.mubr.bf16.gmra.mrb[0].mxu0 %v516
      %v588 = vpop.f32.mrb[0].mxu0
      %v589 = vadd.f32 %v491, %v588
      %v590 = vpop.f32.mrb[0].mxu0
      %v591 = vpop.f32.mrb[0].mxu0
      %v592 = vadd.f32 %v491, %v591
      %v593 = vpop.f32.mrb[0].mxu0
      %594 = vmatprep.mubr.bf16.mxu0 0
      %595 = vmatmul.mubr.bf16.gmra.mrb[0].mxu0 %v519
      %v596 = vpop.f32.mrb[0].mxu0
      %v597 = vadd.f32 %v491, %v596
      %v598 = vpop.f32.mrb[0].mxu0
      %v599 = vpop.f32.mrb[0].mxu0
      %v600 = vadd.f32 %v491, %v599
      %v601 = vpop.f32.mrb[0].mxu0
      %602 = vmatprep.mubr.bf16.mxu0 0
      %603 = vmatmul.mubr.bf16.gmra.mrb[0].mxu0 %v522
      %v604 = vpop.f32.mrb[0].mxu0
      %v605 = vadd.f32 %v491, %v604
      %v606 = vpop.f32.mrb[0].mxu0
      %v607 = vpop.f32.mrb[0].mxu0
      %v608 = vadd.f32 %v491, %v607
      %v609 = vpop.f32.mrb[0].mxu0
      %610 = vmatprep.mubr.bf16.mxu0 0
      %611 = vmatmul.mubr.bf16.gmra.mrb[0].mxu0 %v525
      %v612 = vpop.f32.mrb[0].mxu0
      %v613 = vadd.f32 %v491, %v612
      %v614 = vpop.f32.mrb[0].mxu0
      %v615 = vpop.f32.mrb[0].mxu0
      %v616 = vadd.f32 %v491, %v615
      %v617 = vpop.f32.mrb[0].mxu0
      %618 = vmatprep.mubr.bf16.mxu0 0
      %619 = vmatmul.mubr.bf16.gmra.mrb[0].mxu0 %v528
      %v620 = vpop.f32.mrb[0].mxu0
      %v621 = vadd.f32 %v491, %v620
      %v622 = vpop.f32.mrb[0].mxu0
      %v623 = vpop.f32.mrb[0].mxu0
      %v624 = vadd.f32 %v491, %v623
      %v625 = vpop.f32.mrb[0].mxu0
      %626 = vdwg.mxu0
      %v627 = vmax.f32 %v565, 0.0
      %v628 = vmax.f32 %v568, 0.0
      %v629 = vmax.f32 %v573, 0.0
      %v630 = vmax.f32 %v576, 0.0
      %v631 = vmax.f32 %v581, 0.0
      %v632 = vmax.f32 %v584, 0.0
      %v633 = vmax.f32 %v589, 0.0
      %v634 = vmax.f32 %v592, 0.0
      %v635 = vmax.f32 %v597, 0.0
      %v636 = vmax.f32 %v600, 0.0
      %v637 = vmax.f32 %v605, 0.0
      %v638 = vmax.f32 %v608, 0.0
      %v639 = vmax.f32 %v613, 0.0
      %v640 = vmax.f32 %v616, 0.0
      %v641 = vmax.f32 %v621, 0.0
      %v642 = vmax.f32 %v624, 0.0
      %v643 = vpack.c.bf16 %v628, %v627
      %v644 = vpack.c.bf16 %v630, %v629
      %v645 = vpack.c.bf16 %v632, %v631
      %v646 = vpack.c.bf16 %v634, %v633
      %v647 = vpack.c.bf16 %v636, %v635
      %v648 = vpack.c.bf16 %v638, %v637
      %v649 = vpack.c.bf16 %v640, %v639
      %v650 = vpack.c.bf16 %v642, %v641
      %v651 = vld [vmem:[%s4] sm:$0xf]
      %v652 = vld [vmem:[%s4 + $0x4] sm:$0xf]
      %v653 = vld [vmem:[%s4 + $0x8] sm:$0xf]
      %v654 = vld [vmem:[%s4 + $0xc] sm:$0xf]
      %v655 = vld [vmem:[%s5] sm:$0x1]
      %v657 = vlaneseq
      %v658 = vshrl.u32 %v657, 7
      %v659 = vsub.s32 0, %v658
      %v660 = vrot.slane %v655, %v659
      %v666 = vunpack.c.l.b16 %v651
      %v667 = vunpack.c.l.b16 %v652
      %v668 = vunpack.c.l.b16 %v653
      %v669 = vunpack.c.l.b16 %v654
      %v670 = vpack.c.b16 %v667, %v666
      %v671 = vpack.c.b16 %v669, %v668
      %v675 = vsel %vm505, %v643, 0
      %v678 = vsel %vm505, %v644, 0
      %v681 = vsel %vm505, %v645, 0
      %v684 = vsel %vm505, %v646, 0
      %v687 = vsel %vm505, %v647, 0
      %v690 = vsel %vm505, %v648, 0
      %v693 = vsel %vm505, %v649, 0
      %v696 = vsel %vm505, %v650, 0
      %698 = vmatprep.subr.bf16.mxu0 0
      %699 = vmatpush1.bf16.msra.mxu0 %v670
      %700 = vmatprep.subr.bf16.mxu0 0
      %701 = vmatpush1.bf16.msra.mxu0 %v671
      %702 = vmatprep.subr.bf16.mxu0 0
      %703 = vmatpush1.bf16.msra.mxu0 0
      %704 = vmatprep.subr.bf16.mxu0 0
      %705 = vmatpush1.bf16.msra.mxu0 0
      %706 = vmatprep.subr.bf16.mxu0 0
      %707 = vmatpush1.bf16.msra.mxu0 0
      %708 = vmatprep.subr.bf16.mxu0 0
      %709 = vmatpush1.bf16.msra.mxu0 0
      %710 = vmatprep.subr.bf16.mxu0 0
      %711 = vmatpush1.bf16.msra.mxu0 0
      %712 = vmatprep.subr.bf16.mxu0 0
      %713 = vmatpush1.bf16.msra.mxu0 0
      %714 = vmatprep.subr.bf16.mxu0 0
      %715 = vmatpush1.bf16.msra.mxu0 0
      %716 = vmatprep.subr.bf16.mxu0 0
      %717 = vmatpush1.bf16.msra.mxu0 0
      %718 = vmatprep.subr.bf16.mxu0 0
      %719 = vmatpush1.bf16.msra.mxu0 0
      %720 = vmatprep.subr.bf16.mxu0 0
      %721 = vmatpush1.bf16.msra.mxu0 0
      %722 = vmatprep.subr.bf16.mxu0 0
      %723 = vmatpush1.bf16.msra.mxu0 0
      %724 = vmatprep.subr.bf16.mxu0 0
      %725 = vmatpush1.bf16.msra.mxu0 0
      %726 = vmatprep.subr.bf16.mxu0 0
      %727 = vmatpush1.bf16.msra.mxu0 0
      %728 = vmatprep.subr.bf16.mxu0 0
      %729 = vmatpush1.bf16.msra.mxu0 0
      %730 = vmatprep.mubr.bf16.mxu0 0
      %731 = vmatmul.mubr.bf16.gmra.mrb[0].mxu0 %v675
      %v732 = vpop.f32.mrb[0].mxu0
      %v733 = vadd.f32 %v660, %v732
      %v734 = vpop.f32.mrb[0].mxu0
      %v735 = vpop.f32.mrb[0].mxu0
      %v736 = vadd.f32 %v660, %v735
      %v737 = vpop.f32.mrb[0].mxu0
      %738 = vmatprep.mubr.bf16.mxu0 0
      %739 = vmatmul.mubr.bf16.gmra.mrb[0].mxu0 %v678
      %v740 = vpop.f32.mrb[0].mxu0
      %v741 = vadd.f32 %v660, %v740
      %v742 = vpop.f32.mrb[0].mxu0
      %v743 = vpop.f32.mrb[0].mxu0
      %v744 = vadd.f32 %v660, %v743
      %v745 = vpop.f32.mrb[0].mxu0
      %746 = vmatprep.mubr.bf16.mxu0 0
      %747 = vmatmul.mubr.bf16.gmra.mrb[0].mxu0 %v681
      %v748 = vpop.f32.mrb[0].mxu0
      %v749 = vadd.f32 %v660, %v748
      %v750 = vpop.f32.mrb[0].mxu0
      %v751 = vpop.f32.mrb[0].mxu0
      %v752 = vadd.f32 %v660, %v751
      %v753 = vpop.f32.mrb[0].mxu0
      %754 = vmatprep.mubr.bf16.mxu0 0
      %755 = vmatmul.mubr.bf16.gmra.mrb[0].mxu0 %v684
      %v756 = vpop.f32.mrb[0].mxu0
      %v757 = vadd.f32 %v660, %v756
      %v758 = vpop.f32.mrb[0].mxu0
      %v759 = vpop.f32.mrb[0].mxu0
      %v760 = vadd.f32 %v660, %v759
      %v761 = vpop.f32.mrb[0].mxu0
      %762 = vmatprep.mubr.bf16.mxu0 0
      %763 = vmatmul.mubr.bf16.gmra.mrb[0].mxu0 %v687
      %v764 = vpop.f32.mrb[0].mxu0
      %v765 = vadd.f32 %v660, %v764
      %v766 = vpop.f32.mrb[0].mxu0
      %v767 = vpop.f32.mrb[0].mxu0
      %v768 = vadd.f32 %v660, %v767
      %v769 = vpop.f32.mrb[0].mxu0
      %770 = vmatprep.mubr.bf16.mxu0 0
      %771 = vmatmul.mubr.bf16.gmra.mrb[0].mxu0 %v690
      %v772 = vpop.f32.mrb[0].mxu0
      %v773 = vadd.f32 %v660, %v772
      %v774 = vpop.f32.mrb[0].mxu0
      %v775 = vpop.f32.mrb[0].mxu0
      %v776 = vadd.f32 %v660, %v775
      %v777 = vpop.f32.mrb[0].mxu0
      %778 = vmatprep.mubr.bf16.mxu0 0
      %779 = vmatmul.mubr.bf16.gmra.mrb[0].mxu0 %v693
      %v780 = vpop.f32.mrb[0].mxu0
      %v781 = vadd.f32 %v660, %v780
      %v782 = vpop.f32.mrb[0].mxu0
      %v783 = vpop.f32.mrb[0].mxu0
      %v784 = vadd.f32 %v660, %v783
      %v785 = vpop.f32.mrb[0].mxu0
      %786 = vmatprep.mubr.bf16.mxu0 0
      %787 = vmatmul.mubr.bf16.gmra.mrb[0].mxu0 %v696
      %v788 = vpop.f32.mrb[0].mxu0
      %v789 = vadd.f32 %v660, %v788
      %v790 = vpop.f32.mrb[0].mxu0
      %v791 = vpop.f32.mrb[0].mxu0
      %v792 = vadd.f32 %v660, %v791
      %v793 = vpop.f32.mrb[0].mxu0
      %794 = vdwg.mxu0
      %v795 = vxor.u32 %v733, 2147483648
      %v796 = vxor.u32 %v736, 2147483648
      %v797 = vxor.u32 %v741, 2147483648
      %v798 = vxor.u32 %v744, 2147483648
      %v799 = vxor.u32 %v749, 2147483648
      %v800 = vxor.u32 %v752, 2147483648
      %v801 = vxor.u32 %v757, 2147483648
      %v802 = vxor.u32 %v760, 2147483648
      %v803 = vxor.u32 %v765, 2147483648
      %v804 = vxor.u32 %v768, 2147483648
      %v805 = vxor.u32 %v773, 2147483648
      %v806 = vxor.u32 %v776, 2147483648
      %v807 = vxor.u32 %v781, 2147483648
      %v808 = vxor.u32 %v784, 2147483648
      %v809 = vxor.u32 %v789, 2147483648
      %v810 = vxor.u32 %v792, 2147483648
      %v811 = vmul.f32 %v795, 1.442695
      %v812 = vpow.pop %v811
      %v813 = vmul.f32 %v796, 1.442695
      %v814 = vpow.pop %v813
      %v815 = vmul.f32 %v797, 1.442695
      %v816 = vpow.pop %v815
      %v817 = vmul.f32 %v798, 1.442695
      %v818 = vpow.pop %v817
      %v819 = vmul.f32 %v799, 1.442695
      %v820 = vpow.pop %v819
      %v821 = vmul.f32 %v800, 1.442695
      %v822 = vpow.pop %v821
      %v823 = vmul.f32 %v801, 1.442695
      %v824 = vpow.pop %v823
      %v825 = vmul.f32 %v802, 1.442695
      %v826 = vpow.pop %v825
      %v827 = vmul.f32 %v803, 1.442695
      %v828 = vpow.pop %v827
      %v829 = vmul.f32 %v804, 1.442695
      %v830 = vpow.pop %v829
      %v831 = vmul.f32 %v805, 1.442695
      %v832 = vpow.pop %v831
      %v833 = vmul.f32 %v806, 1.442695
      %v834 = vpow.pop %v833
      %v835 = vmul.f32 %v807, 1.442695
      %v836 = vpow.pop %v835
      %v837 = vmul.f32 %v808, 1.442695
      %v838 = vpow.pop %v837
      %v839 = vmul.f32 %v809, 1.442695
      %v840 = vpow.pop %v839
      %v841 = vmul.f32 %v810, 1.442695
      %v842 = vpow.pop %v841
      %v843 = vadd.f32 %v812, 1.0
      %v844 = vadd.f32 %v814, 1.0
      %v845 = vadd.f32 %v816, 1.0
      %v846 = vadd.f32 %v818, 1.0
      %v847 = vadd.f32 %v820, 1.0
      %v848 = vadd.f32 %v822, 1.0
      %v849 = vadd.f32 %v824, 1.0
      %v850 = vadd.f32 %v826, 1.0
      %v851 = vadd.f32 %v828, 1.0
      %v852 = vadd.f32 %v830, 1.0
      %v853 = vadd.f32 %v832, 1.0
      %v854 = vadd.f32 %v834, 1.0
      %v855 = vadd.f32 %v836, 1.0
      %v856 = vadd.f32 %v838, 1.0
      %v857 = vadd.f32 %v840, 1.0
      %v858 = vadd.f32 %v842, 1.0
      %v859 = vrcp.pop %v843
      %v860 = vmul.f32 1.0, %v859
      %v861 = vrcp.pop %v844
      %v862 = vmul.f32 1.0, %v861
      %v863 = vrcp.pop %v845
      %v864 = vmul.f32 1.0, %v863
      %v865 = vrcp.pop %v846
      %v866 = vmul.f32 1.0, %v865
      %v867 = vrcp.pop %v847
      %v868 = vmul.f32 1.0, %v867
      %v869 = vrcp.pop %v848
      %v870 = vmul.f32 1.0, %v869
      %v871 = vrcp.pop %v849
      %v872 = vmul.f32 1.0, %v871
      %v873 = vrcp.pop %v850
      %v874 = vmul.f32 1.0, %v873
      %v875 = vrcp.pop %v851
      %v876 = vmul.f32 1.0, %v875
      %v877 = vrcp.pop %v852
      %v878 = vmul.f32 1.0, %v877
      %v879 = vrcp.pop %v853
      %v880 = vmul.f32 1.0, %v879
      %v881 = vrcp.pop %v854
      %v882 = vmul.f32 1.0, %v881
      %v883 = vrcp.pop %v855
      %v884 = vmul.f32 1.0, %v883
      %v885 = vrcp.pop %v856
      %v886 = vmul.f32 1.0, %v885
      %v887 = vrcp.pop %v857
      %v888 = vmul.f32 1.0, %v887
      %v889 = vrcp.pop %v858
      %v890 = vmul.f32 1.0, %v889
      %vm891 = vcmask 64512
      %892 = vst.msk [vmem:[%s253] sm:$0xff] %vm891, %v860
      %893 = vst.msk [vmem:[%s253 + $0x8] sm:$0xff] %vm891, %v862
      %894 = vst.msk [vmem:[%s253 + $0x10] sm:$0xff] %vm891, %v864
      %895 = vst.msk [vmem:[%s253 + $0x18] sm:$0xff] %vm891, %v866
      %896 = vst.msk [vmem:[%s253 + $0x20] sm:$0xff] %vm891, %v868
      %897 = vst.msk [vmem:[%s253 + $0x28] sm:$0xff] %vm891, %v870
      %898 = vst.msk [vmem:[%s253 + $0x30] sm:$0xff] %vm891, %v872
      %899 = vst.msk [vmem:[%s253 + $0x38] sm:$0xff] %vm891, %v874
      %900 = vst.msk [vmem:[%s253 + $0x40] sm:$0xff] %vm891, %v876
      %901 = vst.msk [vmem:[%s253 + $0x48] sm:$0xff] %vm891, %v878
      %902 = vst.msk [vmem:[%s253 + $0x50] sm:$0xff] %vm891, %v880
      %903 = vst.msk [vmem:[%s253 + $0x58] sm:$0xff] %vm891, %v882
      %904 = vst.msk [vmem:[%s253 + $0x60] sm:$0xff] %vm891, %v884
      %905 = vst.msk [vmem:[%s253 + $0x68] sm:$0xff] %vm891, %v886
      %906 = vst.msk [vmem:[%s253 + $0x70] sm:$0xff] %vm891, %v888
      %907 = vst.msk [vmem:[%s253 + $0x78] sm:$0xff] %vm891, %v890
      %s908 = smul.u32 16, %s17
      %p909 = scmp.lt.s32.totalorder %s908, 31
      %s910 = scalar_select %p909, %s908, 31
      %s911 = smul.addr %s910, 8
      %s912 = scalar_lea.vmem %s6, %s911
      // Predicated region
      $region45: #{rendering_net_forward.1} parent=43 // pred_check
        %p913 = pneg %p166
      $region46: #{rendering_net_forward.1} parent=43 // pred_check_branch
        %915 = sbr.rel (%p913) target = $region48
      $region47: #{rendering_net_forward.1} parent=43 // pred_region
        %s916 = smul.u32 16, %s17
      $region48: #{rendering_net_forward.1} parent=43 // pred_fallthru
        _
    $region44: #{rendering_net_forward.1} parent=5 // pred_fallthru
      _
    %p917 = scmp.le.s32.totalorder 2, %s12
    // Predicated region
    $region49: #{rendering_net_forward.1} parent=5 // pred_check
      %p918 = pneg %p917
    $region50: #{rendering_net_forward.1} parent=5 // pred_check_branch
      %920 = sbr.rel (%p918) target = $region52
    $region51: #{rendering_net_forward.1} parent=5 // pred_region
      %s921 = ssub.s32 %s12, 2
      // Predicated region
      $region53: #{rendering_net_forward.1} parent=51 // pred_check
        %p922 = pneg %p172
      $region54: #{rendering_net_forward.1} parent=51 // pred_check_branch
        %924 = sbr.rel (%p922) target = $region56
      $region55: #{rendering_net_forward.1} parent=51 // pred_region
        %s925 = smul.u32 16, %s18
        %p926 = scmp.lt.s32.totalorder %s925, 31
        %s927 = scalar_select %p926, %s925, 31
        %s928 = smul.addr %s927, 8
        %s929 = scalar_lea.vmem %s6, %s928
      $region56: #{rendering_net_forward.1} parent=51 // pred_fallthru
        _
    $region52: #{rendering_net_forward.1} parent=5 // pred_fallthru
      _
  $region6: #{rendering_net_forward.1} parent=0 // loop_footer
    %s16 = sadd.s32 1, %s12
  $region7: #{rendering_net_forward.1} parent=0 // loop_footer_branch
    %11 = sbr.rel target = $region3
  $region8: #{rendering_net_forward.1} parent=0 // loop_exit
    _

</llo_original>
